<compile_context>
chip_gen: v7x
topology: tpu7x:2x2x1
jax: 0.10.0
libtpu: 0.0.40
codegen_flags: <defaults>
</compile_context>

<pallas_src>
import numpy as np
import jax
import jax.numpy as jnp
from jax.experimental import pallas as pl
from jax.experimental.pallas import tpu as pltpu


def _make_kernel(NB, H, W, C):
    L = W * C          # lane width of the working layout (128 at C=8, W=16)
    M = NB * H         # matmul M dimension for one grid step

    def kernel(x_ref, wa_ref, bns_ref, bnb_ref, w4_ref, b4_ref, w5_ref, b5_ref,
               o_ref):
        # Per-image row / lane-block masks; computed once, reused by every conv
        # (hoisted so the broadcasts are not re-materialized per conv).
        h_idx = jax.lax.broadcasted_iota(jnp.int32, (NB, H, L), 1).reshape(M, L)
        not_top = h_idx != 0            # row is not h == 0 of its image
        not_bot = h_idx != (H - 1)      # row is not h == H-1 of its image
        lane = jax.lax.broadcasted_iota(jnp.int32, (M, L), 1)
        not_lastw = lane < (L - C)      # lane block is not w == W-1

        def conv3x3(act, w_ref):
            # act: (M, L).  w_ref: (L, 3L) = [B_ky0 | B_ky1 | B_ky2]; each B_ky is
            # a banded (L, L) matrix with the kx taps, channel mixing and the
            # W-direction zero padding folded in.  One MXU launch per conv.
            p = jnp.dot(act, w_ref[...], preferred_element_type=jnp.float32)
            p0 = p[:, 0 * L:1 * L]      # input row r -> contribution to output row r+1
            p1 = p[:, 1 * L:2 * L]      # input row r -> output row r
            p2 = p[:, 2 * L:3 * L]      # input row r -> output row r-1
            # out[h] = p0[h-1] + p1[h] + p2[h+1]; the rolls are XLU sublane
            # rotations, the masks implement H zero padding + batch-seam isolation.
            out = p1 + jnp.where(not_top, pltpu.roll(p0, shift=1, axis=0), 0.0)
            out = out + jnp.where(not_bot, pltpu.roll(p2, shift=M - 1, axis=0), 0.0)
            return out

        x = x_ref[...].reshape(M, L)    # (NB, H, L) -> (M, L): pure major-dim collapse

        # ---- phase1_1: BN(LeakyReLU(conv3x3_nobias(x + x))); the 2x is folded
        #      into wa on the host, so we convolve x directly. ----
        t = conv3x3(x, wa_ref)
        t = jnp.where(t > 0, t, 0.1 * t)            # LeakyReLU(0.1)
        t = t * bns_ref[...] + bnb_ref[...]         # BN eval-mode affine (lane-tiled)

        # ---- conv4(t + x), padding=1, bias ----
        u = conv3x3(t + x, w4_ref) + b4_ref[...]

        # ---- maxpool 2x2 stride 1, kept zero-extended on the full (H, W) grid ----
        m1 = jnp.maximum(u, pltpu.roll(u, shift=M - 1, axis=0))   # max(u[h], u[h+1])
        m2 = pltpu.roll(m1, shift=L - C, axis=1)                  # lane shift: block w -> w+1
        v = jnp.where(jnp.logical_and(not_bot, not_lastw),
                      jnp.maximum(m1, m2), 0.0)

        # ---- conv5(v), padding=1, bias.  v's zero row H-1 / zero block W-1 act as
        #      the padding of the true (H-1, W-1) input, so rows < H-1 and blocks
        #      < W-1 of y are the exact conv5 output; the junk row/col is sliced
        #      off in the wrapper (dense 128-lane writeback). ----
        y = conv3x3(v, w5_ref) + b5_ref[...]
        o_ref[...] = y.reshape(NB, H, L)

    return kernel


def _pick_batch_block(N, H):
    """Smallest divisor of N giving >= 128 matmul rows per grid step (so a
    multi-step grid can be split across v7x's two TensorCores and per-step x/out
    DMAs overlap compute); falls back to the whole batch when N*H < 128."""
    for d in range(1, N + 1):
        if N % d == 0 and d * H >= 128:
            return d
    return N


def objectnet_forward(x_nchw, params, *, batch_block=None):
    """x_nchw: (N, C, H, W) float32 -> (N, C, H-1, W-1) float32."""
    N, C, H, W = x_nchw.shape
    L = W * C
    NB = _pick_batch_block(N, H) if batch_block is None else batch_block
    assert N % NB == 0

    x = jnp.transpose(x_nchw, (0, 2, 3, 1)).reshape(N, H, L)   # NCHW -> lane-dense (N, H, W*C)

    out = pl.pallas_call(
        _make_kernel(NB, H, W, C),
        out_shape=jax.ShapeDtypeStruct((N, H, L), jnp.float32),
        grid_spec=pltpu.PrefetchScalarGridSpec(
            num_scalar_prefetch=0,
            grid=(N // NB,),                                     # parallel batch axis
            in_specs=[
                pl.BlockSpec((NB, H, L), lambda i: (i, 0, 0)),   # x (lane-dense)
                pl.BlockSpec((L, 3 * L), lambda i: (0, 0)),      # phase1_1 banded w (2x folded)
                pl.BlockSpec((1, L), lambda i: (0, 0)),          # BN scale (lane-tiled)
                pl.BlockSpec((1, L), lambda i: (0, 0)),          # BN shift
                pl.BlockSpec((L, 3 * L), lambda i: (0, 0)),      # conv4 banded w
                pl.BlockSpec((1, L), lambda i: (0, 0)),          # conv4 bias
                pl.BlockSpec((L, 3 * L), lambda i: (0, 0)),      # conv5 banded w
                pl.BlockSpec((1, L), lambda i: (0, 0)),          # conv5 bias
            ],
            out_specs=pl.BlockSpec((NB, H, L), lambda i: (i, 0, 0)),
        ),
        compiler_params=pltpu.CompilerParams(dimension_semantics=("parallel",)),
    )(x, params["wa"], params["bn_scale"], params["bn_shift"],
      params["w4"], params["b4"], params["w5"], params["b5"])

    y = out.reshape(N, H, W, C)[:, :H - 1, :W - 1, :]            # drop the junk row/col
    return jnp.transpose(y, (0, 3, 1, 2))                        # NHWC -> NCHW


# ---------------- host-side parameter preprocessing ----------------

def _banded_conv_weights(w_oihw, W):
    """PyTorch (Cout, Cin, 3, 3) -> (W*Cin, 3*W*Cout) banded weight matrix.

    Column block ky holds B_ky with
        B_ky[wi*Cin + ci, wo*Cout + co] = w[co, ci, ky, kx],  wi = wo + kx - 1,
    entries with wi outside [0, W) dropped (W-direction zero padding folded in),
    so the conv's kx taps, channel mixing and W padding become one K=W*Cin matmul.
    """
    w = np.asarray(w_oihw, np.float32)
    Cout, Cin, _, _ = w.shape
    Li, Lo = W * Cin, W * Cout
    B = np.zeros((3, Li, Lo), np.float32)
    for ky in range(3):
        for kx in range(3):
            kmat = w[:, :, ky, kx].T                       # (Cin, Cout)
            for wo in range(W):
                wi = wo + kx - 1
                if 0 <= wi < W:
                    B[ky, wi * Cin:(wi + 1) * Cin, wo * Cout:(wo + 1) * Cout] = kmat
    return jnp.asarray(np.concatenate([B[0], B[1], B[2]], axis=1))


def _tile_channels(v_c, W):
    """Per-channel (C,) vector -> lane-tiled (1, W*C) with value[c] at lane w*C + c."""
    return jnp.tile(jnp.asarray(v_c, jnp.float32), (W,)).reshape(1, -1)


def _reference_forward(x_nchw, raw):
    """Pure-JAX reference of the same live path (in-script self-check only)."""
    dn = ("NCHW", "OIHW", "NCHW")
    hi = jax.lax.Precision.HIGHEST

    def conv(x, w, b=None):
        y = jax.lax.conv_general_dilated(x, w, (1, 1), ((1, 1), (1, 1)),
                                         dimension_numbers=dn, precision=hi)
        return y if b is None else y + b[None, :, None, None]

    t = conv(x_nchw + x_nchw, raw["wa"])
    t = jnp.where(t > 0, t, 0.1 * t)
    t = t * raw["bn_scale"][None, :, None, None] + raw["bn_shift"][None, :, None, None]
    u = conv(t + x_nchw, raw["w4"], raw["b4"])
    v = jnp.maximum(jnp.maximum(u[:, :, :-1, :-1], u[:, :, 1:, :-1]),
                    jnp.maximum(u[:, :, :-1, 1:], u[:, :, 1:, 1:]))
    return conv(v, raw["w5"], raw["b5"])


if __name__ == "__main__":
    N, C, H, W = 2, 8, 16, 16        # in_channels == out_channels (required); W*C = 128 lanes
    key = jax.random.PRNGKey(0)
    ks = jax.random.split(key, 8)
    eps = 1e-5

    def raw_conv_w(k):               # PyTorch Conv2d weight layout (Cout, Cin, 3, 3)
        return 0.1 * jax.random.normal(k, (C, C, 3, 3), jnp.float32)

    wa_raw = raw_conv_w(ks[0])       # phase1_1.conv (bias=False)
    w4_raw = raw_conv_w(ks[3])
    w5_raw = raw_conv_w(ks[5])
    gamma = 1.0 + 0.1 * jax.random.normal(ks[1], (C,), jnp.float32)
    beta = 0.1 * jax.random.normal(ks[2], (C,), jnp.float32)
    b4 = 0.1 * jax.random.normal(ks[4], (C,), jnp.float32)
    b5 = 0.1 * jax.random.normal(ks[6], (C,), jnp.float32)

    # BN eval-mode fold with running_mean=0, running_var=1 (PyTorch init).
    bn_scale = gamma / jnp.sqrt(1.0 + eps)
    bn_shift = beta

    params = {
        "wa": _banded_conv_weights(2.0 * np.asarray(wa_raw), W),   # x + x folded into the weights
        "bn_scale": _tile_channels(bn_scale, W),
        "bn_shift": _tile_channels(bn_shift, W),
        "w4": _banded_conv_weights(w4_raw, W),
        "b4": _tile_channels(b4, W),
        "w5": _banded_conv_weights(w5_raw, W),
        "b5": _tile_channels(b5, W),
    }

    x = jax.random.normal(ks[7], (N, C, H, W), jnp.float32)
    out = objectnet_forward(x, params)
    jax.block_until_ready(out)
    assert out.shape == (N, C, H - 1, W - 1)

    # Self-check against a pure-JAX reference of the same live path.
    ref = _reference_forward(x, dict(wa=wa_raw, bn_scale=bn_scale, bn_shift=bn_shift,
                                     w4=w4_raw, b4=b4, w5=w5_raw, b5=b5))
    np.testing.assert_allclose(np.asarray(out), np.asarray(ref), rtol=5e-2, atol=5e-2)
    print("KERNEL_OK")
</pallas_src>

<mosaic_0001>
module attributes {stable_mosaic.version = 11 : i64} {
  func.func @kernel(%arg0: i32, %arg1: memref<2x16x128xf32, #tpu.memory_space<vmem>>, %arg2: memref<128x384xf32, #tpu.memory_space<vmem>>, %arg3: memref<1x128xf32, #tpu.memory_space<vmem>>, %arg4: memref<1x128xf32, #tpu.memory_space<vmem>>, %arg5: memref<128x384xf32, #tpu.memory_space<vmem>>, %arg6: memref<1x128xf32, #tpu.memory_space<vmem>>, %arg7: memref<128x384xf32, #tpu.memory_space<vmem>>, %arg8: memref<1x128xf32, #tpu.memory_space<vmem>>, %arg9: memref<2x16x128xf32, #tpu.memory_space<vmem>>) attributes {dimension_semantics = [#tpu.dimension_semantics<parallel>], iteration_bounds = array<i64: 1>, scalar_prefetch = 0 : i64, scratch_operands = 0 : i64, tpu.core_type = #tpu.core_type<tc>, window_params = [{transform_indices = @transform_0, window_bounds = array<i64: 2, 16, 128>}, {pipeline_mode = #tpu.pipeline_mode<synchronous>, transform_indices = @transform_1, window_bounds = array<i64: 128, 384>}, {pipeline_mode = #tpu.pipeline_mode<synchronous>, transform_indices = @transform_2, window_bounds = array<i64: 1, 128>}, {pipeline_mode = #tpu.pipeline_mode<synchronous>, transform_indices = @transform_3, window_bounds = array<i64: 1, 128>}, {pipeline_mode = #tpu.pipeline_mode<synchronous>, transform_indices = @transform_4, window_bounds = array<i64: 128, 384>}, {pipeline_mode = #tpu.pipeline_mode<synchronous>, transform_indices = @transform_5, window_bounds = array<i64: 1, 128>}, {pipeline_mode = #tpu.pipeline_mode<synchronous>, transform_indices = @transform_6, window_bounds = array<i64: 128, 384>}, {pipeline_mode = #tpu.pipeline_mode<synchronous>, transform_indices = @transform_7, window_bounds = array<i64: 1, 128>}, {transform_indices = @transform_8, window_bounds = array<i64: 2, 16, 128>}]} {
    %0 = tpu.iota {dimensions = array<i32: 1>} : vector<2x16x128xi32>
    %1 = vector.shape_cast %0 : vector<2x16x128xi32> to vector<32x128xi32>
    %c0_i32 = arith.constant 0 : i32
    %2 = vector.broadcast %c0_i32 : i32 to vector<32x128xi32>
    %3 = arith.cmpi ne, %1, %2 : vector<32x128xi32>
    %c15_i32 = arith.constant 15 : i32
    %4 = vector.broadcast %c15_i32 : i32 to vector<32x128xi32>
    %5 = arith.cmpi ne, %1, %4 : vector<32x128xi32>
    %6 = tpu.iota {dimensions = array<i32: 1>} : vector<32x128xi32>
    %c120_i32 = arith.constant 120 : i32
    %7 = vector.broadcast %c120_i32 : i32 to vector<32x128xi32>
    %8 = arith.cmpi slt, %6, %7 : vector<32x128xi32>
    %c0 = arith.constant 0 : index
    %c0_0 = arith.constant 0 : index
    %c0_1 = arith.constant 0 : index
    %9 = vector.load %arg1[%c0, %c0_0, %c0_1] : memref<2x16x128xf32, #tpu.memory_space<vmem>>, vector<2x16x128xf32>
    %10 = vector.shape_cast %9 : vector<2x16x128xf32> to vector<32x128xf32>
    %c0_2 = arith.constant 0 : index
    %c0_3 = arith.constant 0 : index
    %11 = vector.load %arg2[%c0_2, %c0_3] : memref<128x384xf32, #tpu.memory_space<vmem>>, vector<128x384xf32>
    %cst = arith.constant dense<0.000000e+00> : vector<32x384xf32>
    %12 = tpu.matmul %10, %11, %cst {dimension_numbers = #tpu.dot_dimension_numbers<[1], [0], [0], [1], [0, 0, 1, 1], [], []>} : vector<32x128xf32>, vector<128x384xf32>, vector<32x384xf32> -> vector<32x384xf32>
    %13 = vector.extract_strided_slice %12 {offsets = [0, 0], sizes = [32, 128], strides = [1, 1]} : vector<32x384xf32> to vector<32x128xf32>
    %14 = vector.extract_strided_slice %12 {offsets = [0, 128], sizes = [32, 128], strides = [1, 1]} : vector<32x384xf32> to vector<32x128xf32>
    %15 = vector.extract_strided_slice %12 {offsets = [0, 256], sizes = [32, 128], strides = [1, 1]} : vector<32x384xf32> to vector<32x128xf32>
    %c1_i32 = arith.constant 1 : i32
    %16 = tpu.dynamic_rotate %13 by %c1_i32 dim 0 : vector<32x128xf32>, i32 -> vector<32x128xf32>
    %cst_4 = arith.constant 0.000000e+00 : f32
    %17 = vector.broadcast %cst_4 : f32 to vector<32x128xf32>
    %18 = arith.select %3, %16, %17 : vector<32x128xi1>, vector<32x128xf32>
    %19 = arith.addf %14, %18 : vector<32x128xf32>
    %c31_i32 = arith.constant 31 : i32
    %20 = tpu.dynamic_rotate %15 by %c31_i32 dim 0 : vector<32x128xf32>, i32 -> vector<32x128xf32>
    %cst_5 = arith.constant 0.000000e+00 : f32
    %21 = vector.broadcast %cst_5 : f32 to vector<32x128xf32>
    %22 = arith.select %5, %20, %21 : vector<32x128xi1>, vector<32x128xf32>
    %23 = arith.addf %19, %22 : vector<32x128xf32>
    %cst_6 = arith.constant 0.000000e+00 : f32
    %24 = vector.broadcast %cst_6 : f32 to vector<32x128xf32>
    %25 = arith.cmpf ogt, %23, %24 : vector<32x128xf32>
    %cst_7 = arith.constant 1.000000e-01 : f32
    %26 = vector.broadcast %cst_7 : f32 to vector<32x128xf32>
    %27 = arith.mulf %26, %23 : vector<32x128xf32>
    %28 = arith.select %25, %23, %27 : vector<32x128xi1>, vector<32x128xf32>
    %c0_8 = arith.constant 0 : index
    %c0_9 = arith.constant 0 : index
    %29 = vector.load %arg3[%c0_8, %c0_9] : memref<1x128xf32, #tpu.memory_space<vmem>>, vector<1x128xf32>
    %30 = vector.broadcast %29 : vector<1x128xf32> to vector<32x128xf32>
    %31 = arith.mulf %28, %30 : vector<32x128xf32>
    %c0_10 = arith.constant 0 : index
    %c0_11 = arith.constant 0 : index
    %32 = vector.load %arg4[%c0_10, %c0_11] : memref<1x128xf32, #tpu.memory_space<vmem>>, vector<1x128xf32>
    %33 = vector.broadcast %32 : vector<1x128xf32> to vector<32x128xf32>
    %34 = arith.addf %31, %33 : vector<32x128xf32>
    %35 = arith.addf %34, %10 : vector<32x128xf32>
    %c0_12 = arith.constant 0 : index
    %c0_13 = arith.constant 0 : index
    %36 = vector.load %arg5[%c0_12, %c0_13] : memref<128x384xf32, #tpu.memory_space<vmem>>, vector<128x384xf32>
    %cst_14 = arith.constant dense<0.000000e+00> : vector<32x384xf32>
    %37 = tpu.matmul %35, %36, %cst_14 {dimension_numbers = #tpu.dot_dimension_numbers<[1], [0], [0], [1], [0, 0, 1, 1], [], []>} : vector<32x128xf32>, vector<128x384xf32>, vector<32x384xf32> -> vector<32x384xf32>
    %38 = vector.extract_strided_slice %37 {offsets = [0, 0], sizes = [32, 128], strides = [1, 1]} : vector<32x384xf32> to vector<32x128xf32>
    %39 = vector.extract_strided_slice %37 {offsets = [0, 128], sizes = [32, 128], strides = [1, 1]} : vector<32x384xf32> to vector<32x128xf32>
    %40 = vector.extract_strided_slice %37 {offsets = [0, 256], sizes = [32, 128], strides = [1, 1]} : vector<32x384xf32> to vector<32x128xf32>
    %c1_i32_15 = arith.constant 1 : i32
    %41 = tpu.dynamic_rotate %38 by %c1_i32_15 dim 0 : vector<32x128xf32>, i32 -> vector<32x128xf32>
    %cst_16 = arith.constant 0.000000e+00 : f32
    %42 = vector.broadcast %cst_16 : f32 to vector<32x128xf32>
    %43 = arith.select %3, %41, %42 : vector<32x128xi1>, vector<32x128xf32>
    %44 = arith.addf %39, %43 : vector<32x128xf32>
    %c31_i32_17 = arith.constant 31 : i32
    %45 = tpu.dynamic_rotate %40 by %c31_i32_17 dim 0 : vector<32x128xf32>, i32 -> vector<32x128xf32>
    %cst_18 = arith.constant 0.000000e+00 : f32
    %46 = vector.broadcast %cst_18 : f32 to vector<32x128xf32>
    %47 = arith.select %5, %45, %46 : vector<32x128xi1>, vector<32x128xf32>
    %48 = arith.addf %44, %47 : vector<32x128xf32>
    %c0_19 = arith.constant 0 : index
    %c0_20 = arith.constant 0 : index
    %49 = vector.load %arg6[%c0_19, %c0_20] : memref<1x128xf32, #tpu.memory_space<vmem>>, vector<1x128xf32>
    %50 = vector.broadcast %49 : vector<1x128xf32> to vector<32x128xf32>
    %51 = arith.addf %48, %50 : vector<32x128xf32>
    %c31_i32_21 = arith.constant 31 : i32
    %52 = tpu.dynamic_rotate %51 by %c31_i32_21 dim 0 : vector<32x128xf32>, i32 -> vector<32x128xf32>
    %53 = arith.maximumf %51, %52 : vector<32x128xf32>
    %c120_i32_22 = arith.constant 120 : i32
    %54 = tpu.dynamic_rotate %53 by %c120_i32_22 dim 1 : vector<32x128xf32>, i32 -> vector<32x128xf32>
    %55 = arith.andi %5, %8 : vector<32x128xi1>
    %56 = arith.maximumf %53, %54 : vector<32x128xf32>
    %cst_23 = arith.constant 0.000000e+00 : f32
    %57 = vector.broadcast %cst_23 : f32 to vector<32x128xf32>
    %58 = arith.select %55, %56, %57 : vector<32x128xi1>, vector<32x128xf32>
    %c0_24 = arith.constant 0 : index
    %c0_25 = arith.constant 0 : index
    %59 = vector.load %arg7[%c0_24, %c0_25] : memref<128x384xf32, #tpu.memory_space<vmem>>, vector<128x384xf32>
    %cst_26 = arith.constant dense<0.000000e+00> : vector<32x384xf32>
    %60 = tpu.matmul %58, %59, %cst_26 {dimension_numbers = #tpu.dot_dimension_numbers<[1], [0], [0], [1], [0, 0, 1, 1], [], []>} : vector<32x128xf32>, vector<128x384xf32>, vector<32x384xf32> -> vector<32x384xf32>
    %61 = vector.extract_strided_slice %60 {offsets = [0, 0], sizes = [32, 128], strides = [1, 1]} : vector<32x384xf32> to vector<32x128xf32>
    %62 = vector.extract_strided_slice %60 {offsets = [0, 128], sizes = [32, 128], strides = [1, 1]} : vector<32x384xf32> to vector<32x128xf32>
    %63 = vector.extract_strided_slice %60 {offsets = [0, 256], sizes = [32, 128], strides = [1, 1]} : vector<32x384xf32> to vector<32x128xf32>
    %c1_i32_27 = arith.constant 1 : i32
    %64 = tpu.dynamic_rotate %61 by %c1_i32_27 dim 0 : vector<32x128xf32>, i32 -> vector<32x128xf32>
    %cst_28 = arith.constant 0.000000e+00 : f32
    %65 = vector.broadcast %cst_28 : f32 to vector<32x128xf32>
    %66 = arith.select %3, %64, %65 : vector<32x128xi1>, vector<32x128xf32>
    %67 = arith.addf %62, %66 : vector<32x128xf32>
    %c31_i32_29 = arith.constant 31 : i32
    %68 = tpu.dynamic_rotate %63 by %c31_i32_29 dim 0 : vector<32x128xf32>, i32 -> vector<32x128xf32>
    %cst_30 = arith.constant 0.000000e+00 : f32
    %69 = vector.broadcast %cst_30 : f32 to vector<32x128xf32>
    %70 = arith.select %5, %68, %69 : vector<32x128xi1>, vector<32x128xf32>
    %71 = arith.addf %67, %70 : vector<32x128xf32>
    %c0_31 = arith.constant 0 : index
    %c0_32 = arith.constant 0 : index
    %72 = vector.load %arg8[%c0_31, %c0_32] : memref<1x128xf32, #tpu.memory_space<vmem>>, vector<1x128xf32>
    %73 = vector.broadcast %72 : vector<1x128xf32> to vector<32x128xf32>
    %74 = arith.addf %71, %73 : vector<32x128xf32>
    %75 = vector.shape_cast %74 : vector<32x128xf32> to vector<2x16x128xf32>
    %c0_33 = arith.constant 0 : index
    %c0_34 = arith.constant 0 : index
    %c0_35 = arith.constant 0 : index
    %76 = vector.load %arg9[%c0_33, %c0_34, %c0_35] : memref<2x16x128xf32, #tpu.memory_space<vmem>>, vector<2x16x128xf32>
    tpu.vector_store %arg9[%c0_33, %c0_34, %c0_35], %75 {strides = array<i32>} : memref<2x16x128xf32, #tpu.memory_space<vmem>>, vector<2x16x128xf32>,
    return
  }
  func.func @transform_0(%arg0: i32) -> (i32, i32, i32) {
    %c0_i32 = arith.constant 0 : i32
    %c0_i32_0 = arith.constant 0 : i32
    %c0_i32_1 = arith.constant 0 : i32
    return %arg0, %c0_i32, %c0_i32_0 : i32, i32, i32
  }
  func.func @transform_1(%arg0: i32) -> (i32, i32) {
    %c0_i32 = arith.constant 0 : i32
    %c0_i32_0 = arith.constant 0 : i32
    %c0_i32_1 = arith.constant 0 : i32
    return %c0_i32, %c0_i32_0 : i32, i32
  }
  func.func @transform_2(%arg0: i32) -> (i32, i32) {
    %c0_i32 = arith.constant 0 : i32
    %c0_i32_0 = arith.constant 0 : i32
    %c0_i32_1 = arith.constant 0 : i32
    return %c0_i32, %c0_i32_0 : i32, i32
  }
  func.func @transform_3(%arg0: i32) -> (i32, i32) {
    %c0_i32 = arith.constant 0 : i32
    %c0_i32_0 = arith.constant 0 : i32
    %c0_i32_1 = arith.constant 0 : i32
    return %c0_i32, %c0_i32_0 : i32, i32
  }
  func.func @transform_4(%arg0: i32) -> (i32, i32) {
    %c0_i32 = arith.constant 0 : i32
    %c0_i32_0 = arith.constant 0 : i32
    %c0_i32_1 = arith.constant 0 : i32
    return %c0_i32, %c0_i32_0 : i32, i32
  }
  func.func @transform_5(%arg0: i32) -> (i32, i32) {
    %c0_i32 = arith.constant 0 : i32
    %c0_i32_0 = arith.constant 0 : i32
    %c0_i32_1 = arith.constant 0 : i32
    return %c0_i32, %c0_i32_0 : i32, i32
  }
  func.func @transform_6(%arg0: i32) -> (i32, i32) {
    %c0_i32 = arith.constant 0 : i32
    %c0_i32_0 = arith.constant 0 : i32
    %c0_i32_1 = arith.constant 0 : i32
    return %c0_i32, %c0_i32_0 : i32, i32
  }
  func.func @transform_7(%arg0: i32) -> (i32, i32) {
    %c0_i32 = arith.constant 0 : i32
    %c0_i32_0 = arith.constant 0 : i32
    %c0_i32_1 = arith.constant 0 : i32
    return %c0_i32, %c0_i32_0 : i32, i32
  }
  func.func @transform_8(%arg0: i32) -> (i32, i32, i32) {
    %c0_i32 = arith.constant 0 : i32
    %c0_i32_0 = arith.constant 0 : i32
    %c0_i32_1 = arith.constant 0 : i32
    return %arg0, %c0_i32, %c0_i32_0 : i32, i32, i32
  }
}

</mosaic_0001>

<llo_original>
// kernel: tpu_custom_call.1
$region0: #{tpu_custom_call.1}
  #allocation0 [shape = 'u32[]', space=smem, size = 0x4, offset = 0x4, fixed_abs, tag = 'smem constant byte address 0x4 - core index']
  #allocation1 [shape = 'u32[144,128]{1,0:T(1,128)}', space=vmem, size = 0x12000, scoped, tag = 'internal scratch']
  %s0 = inlined_call_operand.hbm [shape: f32[2,16,128], index: 0, kind: input, shape index: {}]
  %s1 = inlined_call_operand.hbm [shape: f32[128,384], index: 1, kind: input, shape index: {}]
  %s2 = inlined_call_operand.vmem [shape: f32[1,128], index: 2, kind: input, shape index: {}]
  %s3 = inlined_call_operand.vmem [shape: f32[1,128], index: 3, kind: input, shape index: {}]
  %s4 = inlined_call_operand.hbm [shape: f32[128,384], index: 4, kind: input, shape index: {}]
  %s5 = inlined_call_operand.vmem [shape: f32[1,128], index: 5, kind: input, shape index: {}]
  %s6 = inlined_call_operand.hbm [shape: f32[128,384], index: 6, kind: input, shape index: {}]
  %s7 = inlined_call_operand.vmem [shape: f32[1,128], index: 7, kind: input, shape index: {}]
  %s8 = inlined_call_operand.hbm [shape: f32[2,16,128], index: 8, kind: output, shape index: {}]
  %s9 = sld [smem:[#allocation0]]
  $region58: #{tpu_custom_call.1} parent=0
    _
  %s11 = ssub.s32 1, %s9
  %s12 = scalar_select 0, %s11, %s9
  $region1: #{tpu_custom_call.1} parent=0
    #allocation2 [shape = 'u8[16384]{0}', space=vmem, size = 0x4000, scoped, tag = 'input window, operand 0, single buffered']
    #allocation3 [shape = 's32[1]{0}', space=sflag, size = 0x4, scoped, tag = 'scoped memory for tpu_custom_call.1']
    #allocation4 [shape = 's32[1]{0}', space=sflag, size = 0x4, scoped, tag = 'scoped memory for tpu_custom_call.1']
    #allocation5 [shape = 'u8[196608]{0}', space=vmem, size = 0x30000, scoped, tag = 'input window, operand 1, single buffered']
    #allocation6 [shape = 's32[1]{0}', space=sflag, size = 0x4, scoped, tag = 'scoped memory for tpu_custom_call.1']
    #allocation7 [shape = 'u8[196608]{0}', space=vmem, size = 0x30000, scoped, tag = 'input window, operand 4, single buffered']
    #allocation8 [shape = 'u8[196608]{0}', space=vmem, size = 0x30000, scoped, tag = 'input window, operand 6, single buffered']
    #allocation9 [shape = 's32[1]{0}', space=sflag, size = 0x4, scoped, tag = 'scoped memory for tpu_custom_call.1']
    #allocation10 [shape = 'u8[16384]{0}', space=vmem, size = 0x4000, scoped, tag = 'output window, operand 0, single buffered']
    %13 = vsyncpa [#allocation3], 0
    %14 = vsyncpa [#allocation6], 0
    %15 = vsyncpa [#allocation9], 0
    %16 = vsyncpa [#allocation4], 0
    // Predicated region
    $region2: #{tpu_custom_call.1} parent=1 // pred_check
      _
    $region3: #{tpu_custom_call.1} parent=1 // pred_check_branch
      %18 = sbr.rel (0) target = $region5
    $region4: #{tpu_custom_call.1} parent=1 // pred_region
      %s20 = ssub.s32 512, 512
      %21 = vsyncadd [#allocation3], %s20
      %s22 = sshll.u32 [#allocation2], 4
      %s23 = int_to_ptr.vmem [resolvable:$true] %s22
      %28 = dma.hbm_to_vmem [thread:$0]  %s0, 512, %s23, [#allocation3], 128, 128, 8
    $region5: #{tpu_custom_call.1} parent=1 // pred_fallthru
      _
    // Predicated region
    $region6: #{tpu_custom_call.1} parent=1 // pred_check
      _
    $region7: #{tpu_custom_call.1} parent=1 // pred_check_branch
      %30 = sbr.rel (0) target = $region9
    $region8: #{tpu_custom_call.1} parent=1 // pred_region
      %s32 = ssub.s32 6144, 6144
      %33 = vsyncadd [#allocation6], %s32
      %s34 = sshll.u32 [#allocation5], 4
      %s35 = int_to_ptr.vmem [resolvable:$true] %s34
      %40 = dma.hbm_to_vmem [thread:$0]  %s1, 6144, %s35, [#allocation6], 384, 384, 24
    $region9: #{tpu_custom_call.1} parent=1 // pred_fallthru
      _
    // Predicated region
    $region10: #{tpu_custom_call.1} parent=1 // pred_check
      _
    $region11: #{tpu_custom_call.1} parent=1 // pred_check_branch
      %42 = sbr.rel (0) target = $region13
    $region12: #{tpu_custom_call.1} parent=1 // pred_region
      _
    $region13: #{tpu_custom_call.1} parent=1 // pred_fallthru
      _
    // Predicated region
    $region14: #{tpu_custom_call.1} parent=1 // pred_check
      _
    $region15: #{tpu_custom_call.1} parent=1 // pred_check_branch
      %44 = sbr.rel (0) target = $region17
    $region16: #{tpu_custom_call.1} parent=1 // pred_region
      _
    $region17: #{tpu_custom_call.1} parent=1 // pred_fallthru
      _
    // Predicated region
    $region18: #{tpu_custom_call.1} parent=1 // pred_check
      _
    $region19: #{tpu_custom_call.1} parent=1 // pred_check_branch
      %46 = sbr.rel (0) target = $region21
    $region20: #{tpu_custom_call.1} parent=1 // pred_region
      %s48 = ssub.s32 6144, 6144
      %49 = vsyncadd [#allocation6], %s48
      %s50 = sshll.u32 [#allocation7], 4
      %s51 = int_to_ptr.vmem [resolvable:$true] %s50
      %56 = dma.hbm_to_vmem [thread:$0]  %s4, 6144, %s51, [#allocation6], 384, 384, 24
    $region21: #{tpu_custom_call.1} parent=1 // pred_fallthru
      _
    // Predicated region
    $region22: #{tpu_custom_call.1} parent=1 // pred_check
      _
    $region23: #{tpu_custom_call.1} parent=1 // pred_check_branch
      %58 = sbr.rel (0) target = $region25
    $region24: #{tpu_custom_call.1} parent=1 // pred_region
      _
    $region25: #{tpu_custom_call.1} parent=1 // pred_fallthru
      _
    // Predicated region
    $region26: #{tpu_custom_call.1} parent=1 // pred_check
      _
    $region27: #{tpu_custom_call.1} parent=1 // pred_check_branch
      %60 = sbr.rel (0) target = $region29
    $region28: #{tpu_custom_call.1} parent=1 // pred_region
      %s62 = ssub.s32 6144, 6144
      %63 = vsyncadd [#allocation9], %s62
      %s64 = sshll.u32 [#allocation8], 4
      %s65 = int_to_ptr.vmem [resolvable:$true] %s64
      %70 = dma.hbm_to_vmem [thread:$0]  %s6, 6144, %s65, [#allocation9], 384, 384, 24
    $region29: #{tpu_custom_call.1} parent=1 // pred_fallthru
      _
    // Predicated region
    $region30: #{tpu_custom_call.1} parent=1 // pred_check
      _
    $region31: #{tpu_custom_call.1} parent=1 // pred_check_branch
      %72 = sbr.rel (0) target = $region33
    $region32: #{tpu_custom_call.1} parent=1 // pred_region
      _
    $region33: #{tpu_custom_call.1} parent=1 // pred_fallthru
      _
    // Predicated region
    $region34: #{tpu_custom_call.1} parent=1 // pred_check
      _
    $region35: #{tpu_custom_call.1} parent=1 // pred_check_branch
      %74 = sbr.rel (0) target = $region37
    $region36: #{tpu_custom_call.1} parent=1 // pred_region
      %75 = dma.done [#allocation3], 512
    $region37: #{tpu_custom_call.1} parent=1 // pred_fallthru
      _
    // Predicated region
    $region38: #{tpu_custom_call.1} parent=1 // pred_check
      _
    $region39: #{tpu_custom_call.1} parent=1 // pred_check_branch
      %77 = sbr.rel (0) target = $region41
    $region40: #{tpu_custom_call.1} parent=1 // pred_region
      %78 = dma.done [#allocation6], 6144
    $region41: #{tpu_custom_call.1} parent=1 // pred_fallthru
      _
    // Predicated region
    $region42: #{tpu_custom_call.1} parent=1 // pred_check
      _
    $region43: #{tpu_custom_call.1} parent=1 // pred_check_branch
      %80 = sbr.rel (0) target = $region45
    $region44: #{tpu_custom_call.1} parent=1 // pred_region
      %81 = dma.done [#allocation6], 6144
    $region45: #{tpu_custom_call.1} parent=1 // pred_fallthru
      _
    // Predicated region
    $region46: #{tpu_custom_call.1} parent=1 // pred_check
      _
    $region47: #{tpu_custom_call.1} parent=1 // pred_check_branch
      %83 = sbr.rel (0) target = $region49
    $region48: #{tpu_custom_call.1} parent=1 // pred_region
      %84 = dma.done [#allocation9], 6144
    $region49: #{tpu_custom_call.1} parent=1 // pred_fallthru
      _
    %v85 = vlaneseq
    %v86 = vshrl.u32 %v85, 7
    %v87 = vadd.s32 %v86, 8
    %vm88 = vcmp.ne.s32.totalorder %v86, 0
    %vm89 = vcmp.ne.s32.totalorder %v87, 0
    %vm90 = vcmp.ne.s32.totalorder %v86, 15
    %vm91 = vcmp.ne.s32.totalorder %v87, 15
    %v92 = vlaneseq
    %v93 = vand.u32 %v92, 127
    %vm94 = vcmp.lt.s32.totalorder %v93, 120
    %v95 = vld [vmem:[#allocation2] sm:$0xff]
    %v96 = vld [vmem:[#allocation2 + $0x8] sm:$0xff]
    %v97 = vld [vmem:[#allocation2 + $0x10] sm:$0xff]
    %v98 = vld [vmem:[#allocation2 + $0x18] sm:$0xff]
    %v99 = vld [vmem:[#allocation5] sm:$0xff]
    %v100 = vld [vmem:[#allocation5 + $0x8] sm:$0xff]
    %v101 = vld [vmem:[#allocation5 + $0x10] sm:$0xff]
    %v102 = vld [vmem:[#allocation5 + $0x18] sm:$0xff]
    %v103 = vld [vmem:[#allocation5 + $0x20] sm:$0xff]
    %v104 = vld [vmem:[#allocation5 + $0x28] sm:$0xff]
    %v105 = vld [vmem:[#allocation5 + $0x30] sm:$0xff]
    %v106 = vld [vmem:[#allocation5 + $0x38] sm:$0xff]
    %v107 = vld [vmem:[#allocation5 + $0x40] sm:$0xff]
    %v108 = vld [vmem:[#allocation5 + $0x48] sm:$0xff]
    %v109 = vld [vmem:[#allocation5 + $0x50] sm:$0xff]
    %v110 = vld [vmem:[#allocation5 + $0x58] sm:$0xff]
    %v111 = vld [vmem:[#allocation5 + $0x60] sm:$0xff]
    %v112 = vld [vmem:[#allocation5 + $0x68] sm:$0xff]
    %v113 = vld [vmem:[#allocation5 + $0x70] sm:$0xff]
    %v114 = vld [vmem:[#allocation5 + $0x78] sm:$0xff]
    %v115 = vld [vmem:[#allocation5 + $0x80] sm:$0xff]
    %v116 = vld [vmem:[#allocation5 + $0x88] sm:$0xff]
    %v117 = vld [vmem:[#allocation5 + $0x90] sm:$0xff]
    %v118 = vld [vmem:[#allocation5 + $0x98] sm:$0xff]
    %v119 = vld [vmem:[#allocation5 + $0xa0] sm:$0xff]
    %v120 = vld [vmem:[#allocation5 + $0xa8] sm:$0xff]
    %v121 = vld [vmem:[#allocation5 + $0xb0] sm:$0xff]
    %v122 = vld [vmem:[#allocation5 + $0xb8] sm:$0xff]
    %v123 = vld [vmem:[#allocation5 + $0xc0] sm:$0xff]
    %v124 = vld [vmem:[#allocation5 + $0xc8] sm:$0xff]
    %v125 = vld [vmem:[#allocation5 + $0xd0] sm:$0xff]
    %v126 = vld [vmem:[#allocation5 + $0xd8] sm:$0xff]
    %v127 = vld [vmem:[#allocation5 + $0xe0] sm:$0xff]
    %v128 = vld [vmem:[#allocation5 + $0xe8] sm:$0xff]
    %v129 = vld [vmem:[#allocation5 + $0xf0] sm:$0xff]
    %v130 = vld [vmem:[#allocation5 + $0xf8] sm:$0xff]
    %v131 = vld [vmem:[#allocation5 + $0x100] sm:$0xff]
    %v132 = vld [vmem:[#allocation5 + $0x108] sm:$0xff]
    %v133 = vld [vmem:[#allocation5 + $0x110] sm:$0xff]
    %v134 = vld [vmem:[#allocation5 + $0x118] sm:$0xff]
    %v135 = vld [vmem:[#allocation5 + $0x120] sm:$0xff]
    %v136 = vld [vmem:[#allocation5 + $0x128] sm:$0xff]
    %v137 = vld [vmem:[#allocation5 + $0x130] sm:$0xff]
    %v138 = vld [vmem:[#allocation5 + $0x138] sm:$0xff]
    %v139 = vld [vmem:[#allocation5 + $0x140] sm:$0xff]
    %v140 = vld [vmem:[#allocation5 + $0x148] sm:$0xff]
    %v141 = vld [vmem:[#allocation5 + $0x150] sm:$0xff]
    %v142 = vld [vmem:[#allocation5 + $0x158] sm:$0xff]
    %v143 = vld [vmem:[#allocation5 + $0x160] sm:$0xff]
    %v144 = vld [vmem:[#allocation5 + $0x168] sm:$0xff]
    %v145 = vld [vmem:[#allocation5 + $0x170] sm:$0xff]
    %v146 = vld [vmem:[#allocation5 + $0x178] sm:$0xff]
    %147 = vmatprep.subr.mxu0 %v100
    %148 = vmatpush1.msra.mxu0 %v99
    %149 = vmatprep.subr.mxu0 %v103
    %150 = vmatpush1.msra.mxu0 %v102
    %151 = vmatprep.subr.mxu0 %v106
    %152 = vmatpush1.msra.mxu0 %v105
    %153 = vmatprep.subr.mxu0 %v109
    %154 = vmatpush1.msra.mxu0 %v108
    %155 = vmatprep.subr.mxu0 %v112
    %156 = vmatpush1.msra.mxu0 %v111
    %157 = vmatprep.subr.mxu0 %v115
    %158 = vmatpush1.msra.mxu0 %v114
    %159 = vmatprep.subr.mxu0 %v118
    %160 = vmatpush1.msra.mxu0 %v117
    %161 = vmatprep.subr.mxu0 %v121
    %162 = vmatpush1.msra.mxu0 %v120
    %163 = vmatprep.subr.mxu0 %v124
    %164 = vmatpush1.msra.mxu0 %v123
    %165 = vmatprep.subr.mxu0 %v127
    %166 = vmatpush1.msra.mxu0 %v126
    %167 = vmatprep.subr.mxu0 %v130
    %168 = vmatpush1.msra.mxu0 %v129
    %169 = vmatprep.subr.mxu0 %v133
    %170 = vmatpush1.msra.mxu0 %v132
    %171 = vmatprep.subr.mxu0 %v136
    %172 = vmatpush1.msra.mxu0 %v135
    %173 = vmatprep.subr.mxu0 %v139
    %174 = vmatpush1.msra.mxu0 %v138
    %175 = vmatprep.subr.mxu0 %v142
    %176 = vmatpush1.msra.mxu0 %v141
    %177 = vmatprep.subr.mxu0 %v145
    %178 = vmatpush1.msra.mxu0 %v144
    %179 = vmatprep.subr.mxu0 0.0
    %180 = vmatpush1.msra.mxu0 0.0
    %181 = vmatprep.subr.mxu0 0.0
    %182 = vmatpush1.msra.mxu0 0.0
    %183 = vmatprep.subr.mxu0 0.0
    %184 = vmatpush1.msra.mxu0 0.0
    %185 = vmatprep.subr.mxu0 0.0
    %186 = vmatpush1.msra.mxu0 0.0
    %187 = vmatprep.subr.mxu0 0.0
    %188 = vmatpush1.msra.mxu0 0.0
    %189 = vmatprep.subr.mxu0 0.0
    %190 = vmatpush1.msra.mxu0 0.0
    %191 = vmatprep.subr.mxu0 0.0
    %192 = vmatpush1.msra.mxu0 0.0
    %193 = vmatprep.subr.mxu0 0.0
    %194 = vmatpush1.msra.mxu0 0.0
    %195 = vmatprep.subr.mxu0 0.0
    %196 = vmatpush1.msra.mxu0 0.0
    %197 = vmatprep.subr.mxu0 0.0
    %198 = vmatpush1.msra.mxu0 0.0
    %199 = vmatprep.subr.mxu0 0.0
    %200 = vmatpush1.msra.mxu0 0.0
    %201 = vmatprep.subr.mxu0 0.0
    %202 = vmatpush1.msra.mxu0 0.0
    %203 = vmatprep.subr.mxu0 0.0
    %204 = vmatpush1.msra.mxu0 0.0
    %205 = vmatprep.subr.mxu0 0.0
    %206 = vmatpush1.msra.mxu0 0.0
    %207 = vmatprep.subr.mxu0 0.0
    %208 = vmatpush1.msra.mxu0 0.0
    %209 = vmatprep.subr.mxu0 0.0
    %210 = vmatpush1.msra.mxu0 0.0
    %211 = vmatprep.mubr.f32.mxu0 0.0
    %212 = vmatmul.mubr.f32.gmra.mrb[0].mxu0 %v95
    %v213 = vpop.f32.mrb[0].mxu0
    %v214 = vadd.f32 0.0, %v213
    %v215 = vpop.f32.mrb[0].mxu0
    %v216 = vadd.f32 0.0, %v215
    %217 = vmatprep.mubr.f32.mxu0 0.0
    %218 = vmatmul.mubr.f32.gmra.mrb[0].mxu0 %v96
    %v219 = vpop.f32.mrb[0].mxu0
    %v220 = vadd.f32 0.0, %v219
    %v221 = vpop.f32.mrb[0].mxu0
    %v222 = vadd.f32 0.0, %v221
    %223 = vmatprep.mubr.f32.mxu0 0.0
    %224 = vmatmul.mubr.f32.gmra.mrb[0].mxu0 %v97
    %v225 = vpop.f32.mrb[0].mxu0
    %v226 = vadd.f32 0.0, %v225
    %v227 = vpop.f32.mrb[0].mxu0
    %v228 = vadd.f32 0.0, %v227
    %229 = vmatprep.mubr.f32.mxu0 0.0
    %230 = vmatmul.mubr.f32.gmra.mrb[0].mxu0 %v98
    %v231 = vpop.f32.mrb[0].mxu0
    %v232 = vadd.f32 0.0, %v231
    %v233 = vpop.f32.mrb[0].mxu0
    %v234 = vadd.f32 0.0, %v233
    %235 = vdwg.mxu0
    %236 = vmatprep.subr.mxu0 0.0
    %237 = vmatpush1.msra.mxu0 %v101
    %238 = vmatprep.subr.mxu0 0.0
    %239 = vmatpush1.msra.mxu0 %v104
    %240 = vmatprep.subr.mxu0 0.0
    %241 = vmatpush1.msra.mxu0 %v107
    %242 = vmatprep.subr.mxu0 0.0
    %243 = vmatpush1.msra.mxu0 %v110
    %244 = vmatprep.subr.mxu0 0.0
    %245 = vmatpush1.msra.mxu0 %v113
    %246 = vmatprep.subr.mxu0 0.0
    %247 = vmatpush1.msra.mxu0 %v116
    %248 = vmatprep.subr.mxu0 0.0
    %249 = vmatpush1.msra.mxu0 %v119
    %250 = vmatprep.subr.mxu0 0.0
    %251 = vmatpush1.msra.mxu0 %v122
    %252 = vmatprep.subr.mxu0 0.0
    %253 = vmatpush1.msra.mxu0 %v125
    %254 = vmatprep.subr.mxu0 0.0
    %255 = vmatpush1.msra.mxu0 %v128
    %256 = vmatprep.subr.mxu0 0.0
    %257 = vmatpush1.msra.mxu0 %v131
    %258 = vmatprep.subr.mxu0 0.0
    %259 = vmatpush1.msra.mxu0 %v134
    %260 = vmatprep.subr.mxu0 0.0
    %261 = vmatpush1.msra.mxu0 %v137
    %262 = vmatprep.subr.mxu0 0.0
    %263 = vmatpush1.msra.mxu0 %v140
    %264 = vmatprep.subr.mxu0 0.0
    %265 = vmatpush1.msra.mxu0 %v143
    %266 = vmatprep.subr.mxu0 0.0
    %267 = vmatpush1.msra.mxu0 %v146
    %268 = vmatprep.subr.mxu0 0.0
    %269 = vmatpush1.msra.mxu0 0.0
    %270 = vmatprep.subr.mxu0 0.0
    %271 = vmatpush1.msra.mxu0 0.0
    %272 = vmatprep.subr.mxu0 0.0
    %273 = vmatpush1.msra.mxu0 0.0
    %274 = vmatprep.subr.mxu0 0.0
    %275 = vmatpush1.msra.mxu0 0.0
    %276 = vmatprep.subr.mxu0 0.0
    %277 = vmatpush1.msra.mxu0 0.0
    %278 = vmatprep.subr.mxu0 0.0
    %279 = vmatpush1.msra.mxu0 0.0
    %280 = vmatprep.subr.mxu0 0.0
    %281 = vmatpush1.msra.mxu0 0.0
    %282 = vmatprep.subr.mxu0 0.0
    %283 = vmatpush1.msra.mxu0 0.0
    %284 = vmatprep.subr.mxu0 0.0
    %285 = vmatpush1.msra.mxu0 0.0
    %286 = vmatprep.subr.mxu0 0.0
    %287 = vmatpush1.msra.mxu0 0.0
    %288 = vmatprep.subr.mxu0 0.0
    %289 = vmatpush1.msra.mxu0 0.0
    %290 = vmatprep.subr.mxu0 0.0
    %291 = vmatpush1.msra.mxu0 0.0
    %292 = vmatprep.subr.mxu0 0.0
    %293 = vmatpush1.msra.mxu0 0.0
    %294 = vmatprep.subr.mxu0 0.0
    %295 = vmatpush1.msra.mxu0 0.0
    %296 = vmatprep.subr.mxu0 0.0
    %297 = vmatpush1.msra.mxu0 0.0
    %298 = vmatprep.subr.mxu0 0.0
    %299 = vmatpush1.msra.mxu0 0.0
    %300 = vmatprep.mubr.f32.mxu0 0.0
    %301 = vmatmul.mubr.f32.gmra.mrb[0].mxu0 %v95
    %v302 = vpop.f32.mrb[0].mxu0
    %v303 = vadd.f32 0.0, %v302
    %v304 = vpop.f32.mrb[0].mxu0
    %305 = vmatprep.mubr.f32.mxu0 0.0
    %306 = vmatmul.mubr.f32.gmra.mrb[0].mxu0 %v96
    %v307 = vpop.f32.mrb[0].mxu0
    %v308 = vadd.f32 0.0, %v307
    %v309 = vpop.f32.mrb[0].mxu0
    %310 = vmatprep.mubr.f32.mxu0 0.0
    %311 = vmatmul.mubr.f32.gmra.mrb[0].mxu0 %v97
    %v312 = vpop.f32.mrb[0].mxu0
    %v313 = vadd.f32 0.0, %v312
    %v314 = vpop.f32.mrb[0].mxu0
    %315 = vmatprep.mubr.f32.mxu0 0.0
    %316 = vmatmul.mubr.f32.gmra.mrb[0].mxu0 %v98
    %v317 = vpop.f32.mrb[0].mxu0
    %v318 = vadd.f32 0.0, %v317
    %v319 = vpop.f32.mrb[0].mxu0
    %320 = vdwg.mxu0
    %v321 = vrot.slane %v214, 7
    %v322 = vrot.slane %v220, 7
    %v323 = vrot.slane %v226, 7
    %v324 = vrot.slane %v232, 7
    %vm325 = vcmp.lt.s32.totalorder %v86, 1
    %v326 = vsel %vm325, %v323, %v324
    %v327 = vsel %vm325, %v322, %v323
    %v328 = vsel %vm325, %v321, %v322
    %v329 = vsel %vm325, %v324, %v321
    %v330 = vsel %vm88, %v329, 0.0
    %v331 = vsel %vm89, %v328, 0.0
    %v332 = vsel %vm88, %v327, 0.0
    %v333 = vsel %vm89, %v326, 0.0
    %v334 = vadd.f32 %v216, %v330
    %v335 = vadd.f32 %v222, %v331
    %v336 = vadd.f32 %v228, %v332
    %v337 = vadd.f32 %v234, %v333
    %v338 = vrot.slane %v303, 1
    %v339 = vrot.slane %v308, 1
    %v340 = vrot.slane %v313, 1
    %v341 = vrot.slane %v318, 1
    %vm342 = vcmp.lt.s32.totalorder %v86, 7
    %v343 = vsel %vm342, %v340, %v341
    %v344 = vsel %vm342, %v339, %v340
    %v345 = vsel %vm342, %v338, %v339
    %v346 = vsel %vm342, %v341, %v338
    %v347 = vsel %vm90, %v345, 0.0
    %v348 = vsel %vm91, %v344, 0.0
    %v349 = vsel %vm90, %v343, 0.0
    %v350 = vsel %vm91, %v346, 0.0
    %v351 = vadd.f32 %v334, %v347
    %v352 = vadd.f32 %v335, %v348
    %v353 = vadd.f32 %v336, %v349
    %v354 = vadd.f32 %v337, %v350
    %vm355 = vcmp.gt.f32.partialorder %v351, 0.0
    %vm356 = vcmp.gt.f32.partialorder %v352, 0.0
    %vm357 = vcmp.gt.f32.partialorder %v353, 0.0
    %vm358 = vcmp.gt.f32.partialorder %v354, 0.0
    %v359 = vmul.f32 %v351, 0.1
    %v360 = vmul.f32 %v352, 0.1
    %v361 = vmul.f32 %v353, 0.1
    %v362 = vmul.f32 %v354, 0.1
    %v363 = vsel %vm355, %v351, %v359
    %v364 = vsel %vm356, %v352, %v360
    %v365 = vsel %vm357, %v353, %v361
    %v366 = vsel %vm358, %v354, %v362
    %v367 = vld [vmem:[%s2] sm:$0x1]
    %v369 = vlaneseq
    %v370 = vshrl.u32 %v369, 7
    %v371 = vsub.s32 0, %v370
    %v372 = vrot.slane %v367, %v371
    %v374 = vmul.f32 %v363, %v372
    %v375 = vmul.f32 %v364, %v372
    %v376 = vmul.f32 %v365, %v372
    %v377 = vmul.f32 %v366, %v372
    %v378 = vld [vmem:[%s3] sm:$0x1]
    %v380 = vlaneseq
    %v381 = vshrl.u32 %v380, 7
    %v382 = vsub.s32 0, %v381
    %v383 = vrot.slane %v378, %v382
    %v385 = vadd.f32 %v374, %v383
    %v386 = vadd.f32 %v375, %v383
    %v387 = vadd.f32 %v376, %v383
    %v388 = vadd.f32 %v377, %v383
    %v389 = vadd.f32 %v385, %v95
    %v390 = vadd.f32 %v386, %v96
    %v391 = vadd.f32 %v387, %v97
    %v392 = vadd.f32 %v388, %v98
    %v393 = vld [vmem:[#allocation7] sm:$0xff]
    %v394 = vld [vmem:[#allocation7 + $0x8] sm:$0xff]
    %v395 = vld [vmem:[#allocation7 + $0x10] sm:$0xff]
    %v396 = vld [vmem:[#allocation7 + $0x18] sm:$0xff]
    %v397 = vld [vmem:[#allocation7 + $0x20] sm:$0xff]
    %v398 = vld [vmem:[#allocation7 + $0x28] sm:$0xff]
    %v399 = vld [vmem:[#allocation7 + $0x30] sm:$0xff]
    %v400 = vld [vmem:[#allocation7 + $0x38] sm:$0xff]
    %v401 = vld [vmem:[#allocation7 + $0x40] sm:$0xff]
    %v402 = vld [vmem:[#allocation7 + $0x48] sm:$0xff]
    %v403 = vld [vmem:[#allocation7 + $0x50] sm:$0xff]
    %v404 = vld [vmem:[#allocation7 + $0x58] sm:$0xff]
    %v405 = vld [vmem:[#allocation7 + $0x60] sm:$0xff]
    %v406 = vld [vmem:[#allocation7 + $0x68] sm:$0xff]
    %v407 = vld [vmem:[#allocation7 + $0x70] sm:$0xff]
    %v408 = vld [vmem:[#allocation7 + $0x78] sm:$0xff]
    %v409 = vld [vmem:[#allocation7 + $0x80] sm:$0xff]
    %v410 = vld [vmem:[#allocation7 + $0x88] sm:$0xff]
    %v411 = vld [vmem:[#allocation7 + $0x90] sm:$0xff]
    %v412 = vld [vmem:[#allocation7 + $0x98] sm:$0xff]
    %v413 = vld [vmem:[#allocation7 + $0xa0] sm:$0xff]
    %v414 = vld [vmem:[#allocation7 + $0xa8] sm:$0xff]
    %v415 = vld [vmem:[#allocation7 + $0xb0] sm:$0xff]
    %v416 = vld [vmem:[#allocation7 + $0xb8] sm:$0xff]
    %v417 = vld [vmem:[#allocation7 + $0xc0] sm:$0xff]
    %v418 = vld [vmem:[#allocation7 + $0xc8] sm:$0xff]
    %v419 = vld [vmem:[#allocation7 + $0xd0] sm:$0xff]
    %v420 = vld [vmem:[#allocation7 + $0xd8] sm:$0xff]
    %v421 = vld [vmem:[#allocation7 + $0xe0] sm:$0xff]
    %v422 = vld [vmem:[#allocation7 + $0xe8] sm:$0xff]
    %v423 = vld [vmem:[#allocation7 + $0xf0] sm:$0xff]
    %v424 = vld [vmem:[#allocation7 + $0xf8] sm:$0xff]
    %v425 = vld [vmem:[#allocation7 + $0x100] sm:$0xff]
    %v426 = vld [vmem:[#allocation7 + $0x108] sm:$0xff]
    %v427 = vld [vmem:[#allocation7 + $0x110] sm:$0xff]
    %v428 = vld [vmem:[#allocation7 + $0x118] sm:$0xff]
    %v429 = vld [vmem:[#allocation7 + $0x120] sm:$0xff]
    %v430 = vld [vmem:[#allocation7 + $0x128] sm:$0xff]
    %v431 = vld [vmem:[#allocation7 + $0x130] sm:$0xff]
    %v432 = vld [vmem:[#allocation7 + $0x138] sm:$0xff]
    %v433 = vld [vmem:[#allocation7 + $0x140] sm:$0xff]
    %v434 = vld [vmem:[#allocation7 + $0x148] sm:$0xff]
    %v435 = vld [vmem:[#allocation7 + $0x150] sm:$0xff]
    %v436 = vld [vmem:[#allocation7 + $0x158] sm:$0xff]
    %v437 = vld [vmem:[#allocation7 + $0x160] sm:$0xff]
    %v438 = vld [vmem:[#allocation7 + $0x168] sm:$0xff]
    %v439 = vld [vmem:[#allocation7 + $0x170] sm:$0xff]
    %v440 = vld [vmem:[#allocation7 + $0x178] sm:$0xff]
    %441 = vmatprep.subr.mxu0 %v394
    %442 = vmatpush1.msra.mxu0 %v393
    %443 = vmatprep.subr.mxu0 %v397
    %444 = vmatpush1.msra.mxu0 %v396
    %445 = vmatprep.subr.mxu0 %v400
    %446 = vmatpush1.msra.mxu0 %v399
    %447 = vmatprep.subr.mxu0 %v403
    %448 = vmatpush1.msra.mxu0 %v402
    %449 = vmatprep.subr.mxu0 %v406
    %450 = vmatpush1.msra.mxu0 %v405
    %451 = vmatprep.subr.mxu0 %v409
    %452 = vmatpush1.msra.mxu0 %v408
    %453 = vmatprep.subr.mxu0 %v412
    %454 = vmatpush1.msra.mxu0 %v411
    %455 = vmatprep.subr.mxu0 %v415
    %456 = vmatpush1.msra.mxu0 %v414
    %457 = vmatprep.subr.mxu0 %v418
    %458 = vmatpush1.msra.mxu0 %v417
    %459 = vmatprep.subr.mxu0 %v421
    %460 = vmatpush1.msra.mxu0 %v420
    %461 = vmatprep.subr.mxu0 %v424
    %462 = vmatpush1.msra.mxu0 %v423
    %463 = vmatprep.subr.mxu0 %v427
    %464 = vmatpush1.msra.mxu0 %v426
    %465 = vmatprep.subr.mxu0 %v430
    %466 = vmatpush1.msra.mxu0 %v429
    %467 = vmatprep.subr.mxu0 %v433
    %468 = vmatpush1.msra.mxu0 %v432
    %469 = vmatprep.subr.mxu0 %v436
    %470 = vmatpush1.msra.mxu0 %v435
    %471 = vmatprep.subr.mxu0 %v439
    %472 = vmatpush1.msra.mxu0 %v438
    %473 = vmatprep.subr.mxu0 0.0
    %474 = vmatpush1.msra.mxu0 0.0
    %475 = vmatprep.subr.mxu0 0.0
    %476 = vmatpush1.msra.mxu0 0.0
    %477 = vmatprep.subr.mxu0 0.0
    %478 = vmatpush1.msra.mxu0 0.0
    %479 = vmatprep.subr.mxu0 0.0
    %480 = vmatpush1.msra.mxu0 0.0
    %481 = vmatprep.subr.mxu0 0.0
    %482 = vmatpush1.msra.mxu0 0.0
    %483 = vmatprep.subr.mxu0 0.0
    %484 = vmatpush1.msra.mxu0 0.0
    %485 = vmatprep.subr.mxu0 0.0
    %486 = vmatpush1.msra.mxu0 0.0
    %487 = vmatprep.subr.mxu0 0.0
    %488 = vmatpush1.msra.mxu0 0.0
    %489 = vmatprep.subr.mxu0 0.0
    %490 = vmatpush1.msra.mxu0 0.0
    %491 = vmatprep.subr.mxu0 0.0
    %492 = vmatpush1.msra.mxu0 0.0
    %493 = vmatprep.subr.mxu0 0.0
    %494 = vmatpush1.msra.mxu0 0.0
    %495 = vmatprep.subr.mxu0 0.0
    %496 = vmatpush1.msra.mxu0 0.0
    %497 = vmatprep.subr.mxu0 0.0
    %498 = vmatpush1.msra.mxu0 0.0
    %499 = vmatprep.subr.mxu0 0.0
    %500 = vmatpush1.msra.mxu0 0.0
    %501 = vmatprep.subr.mxu0 0.0
    %502 = vmatpush1.msra.mxu0 0.0
    %503 = vmatprep.subr.mxu0 0.0
    %504 = vmatpush1.msra.mxu0 0.0
    %505 = vmatprep.mubr.f32.mxu0 0.0
    %506 = vmatmul.mubr.f32.gmra.mrb[0].mxu0 %v389
    %v507 = vpop.f32.mrb[0].mxu0
    %v508 = vadd.f32 0.0, %v507
    %v509 = vpop.f32.mrb[0].mxu0
    %v510 = vadd.f32 0.0, %v509
    %511 = vmatprep.mubr.f32.mxu0 0.0
    %512 = vmatmul.mubr.f32.gmra.mrb[0].mxu0 %v390
    %v513 = vpop.f32.mrb[0].mxu0
    %v514 = vadd.f32 0.0, %v513
    %v515 = vpop.f32.mrb[0].mxu0
    %v516 = vadd.f32 0.0, %v515
    %517 = vmatprep.mubr.f32.mxu0 0.0
    %518 = vmatmul.mubr.f32.gmra.mrb[0].mxu0 %v391
    %v519 = vpop.f32.mrb[0].mxu0
    %v520 = vadd.f32 0.0, %v519
    %v521 = vpop.f32.mrb[0].mxu0
    %v522 = vadd.f32 0.0, %v521
    %523 = vmatprep.mubr.f32.mxu0 0.0
    %524 = vmatmul.mubr.f32.gmra.mrb[0].mxu0 %v392
    %v525 = vpop.f32.mrb[0].mxu0
    %v526 = vadd.f32 0.0, %v525
    %v527 = vpop.f32.mrb[0].mxu0
    %v528 = vadd.f32 0.0, %v527
    %529 = vdwg.mxu0
    %530 = vmatprep.subr.mxu0 0.0
    %531 = vmatpush1.msra.mxu0 %v395
    %532 = vmatprep.subr.mxu0 0.0
    %533 = vmatpush1.msra.mxu0 %v398
    %534 = vmatprep.subr.mxu0 0.0
    %535 = vmatpush1.msra.mxu0 %v401
    %536 = vmatprep.subr.mxu0 0.0
    %537 = vmatpush1.msra.mxu0 %v404
    %538 = vmatprep.subr.mxu0 0.0
    %539 = vmatpush1.msra.mxu0 %v407
    %540 = vmatprep.subr.mxu0 0.0
    %541 = vmatpush1.msra.mxu0 %v410
    %542 = vmatprep.subr.mxu0 0.0
    %543 = vmatpush1.msra.mxu0 %v413
    %544 = vmatprep.subr.mxu0 0.0
    %545 = vmatpush1.msra.mxu0 %v416
    %546 = vmatprep.subr.mxu0 0.0
    %547 = vmatpush1.msra.mxu0 %v419
    %548 = vmatprep.subr.mxu0 0.0
    %549 = vmatpush1.msra.mxu0 %v422
    %550 = vmatprep.subr.mxu0 0.0
    %551 = vmatpush1.msra.mxu0 %v425
    %552 = vmatprep.subr.mxu0 0.0
    %553 = vmatpush1.msra.mxu0 %v428
    %554 = vmatprep.subr.mxu0 0.0
    %555 = vmatpush1.msra.mxu0 %v431
    %556 = vmatprep.subr.mxu0 0.0
    %557 = vmatpush1.msra.mxu0 %v434
    %558 = vmatprep.subr.mxu0 0.0
    %559 = vmatpush1.msra.mxu0 %v437
    %560 = vmatprep.subr.mxu0 0.0
    %561 = vmatpush1.msra.mxu0 %v440
    %562 = vmatprep.subr.mxu0 0.0
    %563 = vmatpush1.msra.mxu0 0.0
    %564 = vmatprep.subr.mxu0 0.0
    %565 = vmatpush1.msra.mxu0 0.0
    %566 = vmatprep.subr.mxu0 0.0
    %567 = vmatpush1.msra.mxu0 0.0
    %568 = vmatprep.subr.mxu0 0.0
    %569 = vmatpush1.msra.mxu0 0.0
    %570 = vmatprep.subr.mxu0 0.0
    %571 = vmatpush1.msra.mxu0 0.0
    %572 = vmatprep.subr.mxu0 0.0
    %573 = vmatpush1.msra.mxu0 0.0
    %574 = vmatprep.subr.mxu0 0.0
    %575 = vmatpush1.msra.mxu0 0.0
    %576 = vmatprep.subr.mxu0 0.0
    %577 = vmatpush1.msra.mxu0 0.0
    %578 = vmatprep.subr.mxu0 0.0
    %579 = vmatpush1.msra.mxu0 0.0
    %580 = vmatprep.subr.mxu0 0.0
    %581 = vmatpush1.msra.mxu0 0.0
    %582 = vmatprep.subr.mxu0 0.0
    %583 = vmatpush1.msra.mxu0 0.0
    %584 = vmatprep.subr.mxu0 0.0
    %585 = vmatpush1.msra.mxu0 0.0
    %586 = vmatprep.subr.mxu0 0.0
    %587 = vmatpush1.msra.mxu0 0.0
    %588 = vmatprep.subr.mxu0 0.0
    %589 = vmatpush1.msra.mxu0 0.0
    %590 = vmatprep.subr.mxu0 0.0
    %591 = vmatpush1.msra.mxu0 0.0
    %592 = vmatprep.subr.mxu0 0.0
    %593 = vmatpush1.msra.mxu0 0.0
    %594 = vmatprep.mubr.f32.mxu0 0.0
    %595 = vmatmul.mubr.f32.gmra.mrb[0].mxu0 %v389
    %v596 = vpop.f32.mrb[0].mxu0
    %v597 = vadd.f32 0.0, %v596
    %v598 = vpop.f32.mrb[0].mxu0
    %599 = vmatprep.mubr.f32.mxu0 0.0
    %600 = vmatmul.mubr.f32.gmra.mrb[0].mxu0 %v390
    %v601 = vpop.f32.mrb[0].mxu0
    %v602 = vadd.f32 0.0, %v601
    %v603 = vpop.f32.mrb[0].mxu0
    %604 = vmatprep.mubr.f32.mxu0 0.0
    %605 = vmatmul.mubr.f32.gmra.mrb[0].mxu0 %v391
    %v606 = vpop.f32.mrb[0].mxu0
    %v607 = vadd.f32 0.0, %v606
    %v608 = vpop.f32.mrb[0].mxu0
    %609 = vmatprep.mubr.f32.mxu0 0.0
    %610 = vmatmul.mubr.f32.gmra.mrb[0].mxu0 %v392
    %v611 = vpop.f32.mrb[0].mxu0
    %v612 = vadd.f32 0.0, %v611
    %v613 = vpop.f32.mrb[0].mxu0
    %614 = vdwg.mxu0
    %v615 = vrot.slane %v508, 7
    %v616 = vrot.slane %v514, 7
    %v617 = vrot.slane %v520, 7
    %v618 = vrot.slane %v526, 7
    %v619 = vsel %vm325, %v617, %v618
    %v620 = vsel %vm325, %v616, %v617
    %v621 = vsel %vm325, %v615, %v616
    %v622 = vsel %vm325, %v618, %v615
    %v623 = vsel %vm88, %v622, 0.0
    %v624 = vsel %vm89, %v621, 0.0
    %v625 = vsel %vm88, %v620, 0.0
    %v626 = vsel %vm89, %v619, 0.0
    %v627 = vadd.f32 %v510, %v623
    %v628 = vadd.f32 %v516, %v624
    %v629 = vadd.f32 %v522, %v625
    %v630 = vadd.f32 %v528, %v626
    %v631 = vrot.slane %v597, 1
    %v632 = vrot.slane %v602, 1
    %v633 = vrot.slane %v607, 1
    %v634 = vrot.slane %v612, 1
    %v635 = vsel %vm342, %v633, %v634
    %v636 = vsel %vm342, %v632, %v633
    %v637 = vsel %vm342, %v631, %v632
    %v638 = vsel %vm342, %v634, %v631
    %v639 = vsel %vm90, %v637, 0.0
    %v640 = vsel %vm91, %v636, 0.0
    %v641 = vsel %vm90, %v635, 0.0
    %v642 = vsel %vm91, %v638, 0.0
    %v643 = vadd.f32 %v627, %v639
    %v644 = vadd.f32 %v628, %v640
    %v645 = vadd.f32 %v629, %v641
    %v646 = vadd.f32 %v630, %v642
    %v647 = vld [vmem:[%s5] sm:$0x1]
    %v649 = vlaneseq
    %v650 = vshrl.u32 %v649, 7
    %v651 = vsub.s32 0, %v650
    %v652 = vrot.slane %v647, %v651
    %v654 = vadd.f32 %v643, %v652
    %v655 = vadd.f32 %v644, %v652
    %v656 = vadd.f32 %v645, %v652
    %v657 = vadd.f32 %v646, %v652
    %v658 = vrot.slane %v654, 1
    %v659 = vrot.slane %v655, 1
    %v660 = vrot.slane %v656, 1
    %v661 = vrot.slane %v657, 1
    %v662 = vsel %vm342, %v660, %v661
    %v663 = vsel %vm342, %v659, %v660
    %v664 = vsel %vm342, %v658, %v659
    %v665 = vsel %vm342, %v661, %v658
    %v666 = vmax.f32 %v654, %v664
    %v667 = vmax.f32 %v655, %v663
    %v668 = vmax.f32 %v656, %v662
    %v669 = vmax.f32 %v657, %v665
    %670 = vrot.lane.b32.xlu0 %v666, 120
    %v671 = vpop.permute.xlu0 %670
    %672 = vrot.lane.b32.xlu0 %v667, 120
    %v673 = vpop.permute.xlu0 %672
    %674 = vrot.lane.b32.xlu0 %v668, 120
    %v675 = vpop.permute.xlu0 %674
    %676 = vrot.lane.b32.xlu0 %v669, 120
    %v677 = vpop.permute.xlu0 %676
    %vm678 = vmand %vm90, %vm94
    %vm679 = vmand %vm91, %vm94
    %v680 = vmax.f32 %v666, %v671
    %v681 = vmax.f32 %v667, %v673
    %v682 = vmax.f32 %v668, %v675
    %v683 = vmax.f32 %v669, %v677
    %v684 = vsel %vm678, %v680, 0.0
    %v685 = vsel %vm679, %v681, 0.0
    %v686 = vsel %vm678, %v682, 0.0
    %v687 = vsel %vm679, %v683, 0.0
    %v688 = vld [vmem:[#allocation8] sm:$0xff]
    %v689 = vld [vmem:[#allocation8 + $0x8] sm:$0xff]
    %v690 = vld [vmem:[#allocation8 + $0x10] sm:$0xff]
    %v691 = vld [vmem:[#allocation8 + $0x18] sm:$0xff]
    %v692 = vld [vmem:[#allocation8 + $0x20] sm:$0xff]
    %v693 = vld [vmem:[#allocation8 + $0x28] sm:$0xff]
    %v694 = vld [vmem:[#allocation8 + $0x30] sm:$0xff]
    %v695 = vld [vmem:[#allocation8 + $0x38] sm:$0xff]
    %v696 = vld [vmem:[#allocation8 + $0x40] sm:$0xff]
    %v697 = vld [vmem:[#allocation8 + $0x48] sm:$0xff]
    %v698 = vld [vmem:[#allocation8 + $0x50] sm:$0xff]
    %v699 = vld [vmem:[#allocation8 + $0x58] sm:$0xff]
    %v700 = vld [vmem:[#allocation8 + $0x60] sm:$0xff]
    %v701 = vld [vmem:[#allocation8 + $0x68] sm:$0xff]
    %v702 = vld [vmem:[#allocation8 + $0x70] sm:$0xff]
    %v703 = vld [vmem:[#allocation8 + $0x78] sm:$0xff]
    %v704 = vld [vmem:[#allocation8 + $0x80] sm:$0xff]
    %v705 = vld [vmem:[#allocation8 + $0x88] sm:$0xff]
    %v706 = vld [vmem:[#allocation8 + $0x90] sm:$0xff]
    %v707 = vld [vmem:[#allocation8 + $0x98] sm:$0xff]
    %v708 = vld [vmem:[#allocation8 + $0xa0] sm:$0xff]
    %v709 = vld [vmem:[#allocation8 + $0xa8] sm:$0xff]
    %v710 = vld [vmem:[#allocation8 + $0xb0] sm:$0xff]
    %v711 = vld [vmem:[#allocation8 + $0xb8] sm:$0xff]
    %v712 = vld [vmem:[#allocation8 + $0xc0] sm:$0xff]
    %v713 = vld [vmem:[#allocation8 + $0xc8] sm:$0xff]
    %v714 = vld [vmem:[#allocation8 + $0xd0] sm:$0xff]
    %v715 = vld [vmem:[#allocation8 + $0xd8] sm:$0xff]
    %v716 = vld [vmem:[#allocation8 + $0xe0] sm:$0xff]
    %v717 = vld [vmem:[#allocation8 + $0xe8] sm:$0xff]
    %v718 = vld [vmem:[#allocation8 + $0xf0] sm:$0xff]
    %v719 = vld [vmem:[#allocation8 + $0xf8] sm:$0xff]
    %v720 = vld [vmem:[#allocation8 + $0x100] sm:$0xff]
    %v721 = vld [vmem:[#allocation8 + $0x108] sm:$0xff]
    %v722 = vld [vmem:[#allocation8 + $0x110] sm:$0xff]
    %v723 = vld [vmem:[#allocation8 + $0x118] sm:$0xff]
    %v724 = vld [vmem:[#allocation8 + $0x120] sm:$0xff]
    %v725 = vld [vmem:[#allocation8 + $0x128] sm:$0xff]
    %v726 = vld [vmem:[#allocation8 + $0x130] sm:$0xff]
    %v727 = vld [vmem:[#allocation8 + $0x138] sm:$0xff]
    %v728 = vld [vmem:[#allocation8 + $0x140] sm:$0xff]
    %v729 = vld [vmem:[#allocation8 + $0x148] sm:$0xff]
    %v730 = vld [vmem:[#allocation8 + $0x150] sm:$0xff]
    %v731 = vld [vmem:[#allocation8 + $0x158] sm:$0xff]
    %v732 = vld [vmem:[#allocation8 + $0x160] sm:$0xff]
    %v733 = vld [vmem:[#allocation8 + $0x168] sm:$0xff]
    %v734 = vld [vmem:[#allocation8 + $0x170] sm:$0xff]
    %v735 = vld [vmem:[#allocation8 + $0x178] sm:$0xff]
    %736 = vmatprep.subr.mxu0 %v689
    %737 = vmatpush1.msra.mxu0 %v688
    %738 = vmatprep.subr.mxu0 %v692
    %739 = vmatpush1.msra.mxu0 %v691
    %740 = vmatprep.subr.mxu0 %v695
    %741 = vmatpush1.msra.mxu0 %v694
    %742 = vmatprep.subr.mxu0 %v698
    %743 = vmatpush1.msra.mxu0 %v697
    %744 = vmatprep.subr.mxu0 %v701
    %745 = vmatpush1.msra.mxu0 %v700
    %746 = vmatprep.subr.mxu0 %v704
    %747 = vmatpush1.msra.mxu0 %v703
    %748 = vmatprep.subr.mxu0 %v707
    %749 = vmatpush1.msra.mxu0 %v706
    %750 = vmatprep.subr.mxu0 %v710
    %751 = vmatpush1.msra.mxu0 %v709
    %752 = vmatprep.subr.mxu0 %v713
    %753 = vmatpush1.msra.mxu0 %v712
    %754 = vmatprep.subr.mxu0 %v716
    %755 = vmatpush1.msra.mxu0 %v715
    %756 = vmatprep.subr.mxu0 %v719
    %757 = vmatpush1.msra.mxu0 %v718
    %758 = vmatprep.subr.mxu0 %v722
    %759 = vmatpush1.msra.mxu0 %v721
    %760 = vmatprep.subr.mxu0 %v725
    %761 = vmatpush1.msra.mxu0 %v724
    %762 = vmatprep.subr.mxu0 %v728
    %763 = vmatpush1.msra.mxu0 %v727
    %764 = vmatprep.subr.mxu0 %v731
    %765 = vmatpush1.msra.mxu0 %v730
    %766 = vmatprep.subr.mxu0 %v734
    %767 = vmatpush1.msra.mxu0 %v733
    %768 = vmatprep.subr.mxu0 0.0
    %769 = vmatpush1.msra.mxu0 0.0
    %770 = vmatprep.subr.mxu0 0.0
    %771 = vmatpush1.msra.mxu0 0.0
    %772 = vmatprep.subr.mxu0 0.0
    %773 = vmatpush1.msra.mxu0 0.0
    %774 = vmatprep.subr.mxu0 0.0
    %775 = vmatpush1.msra.mxu0 0.0
    %776 = vmatprep.subr.mxu0 0.0
    %777 = vmatpush1.msra.mxu0 0.0
    %778 = vmatprep.subr.mxu0 0.0
    %779 = vmatpush1.msra.mxu0 0.0
    %780 = vmatprep.subr.mxu0 0.0
    %781 = vmatpush1.msra.mxu0 0.0
    %782 = vmatprep.subr.mxu0 0.0
    %783 = vmatpush1.msra.mxu0 0.0
    %784 = vmatprep.subr.mxu0 0.0
    %785 = vmatpush1.msra.mxu0 0.0
    %786 = vmatprep.subr.mxu0 0.0
    %787 = vmatpush1.msra.mxu0 0.0
    %788 = vmatprep.subr.mxu0 0.0
    %789 = vmatpush1.msra.mxu0 0.0
    %790 = vmatprep.subr.mxu0 0.0
    %791 = vmatpush1.msra.mxu0 0.0
    %792 = vmatprep.subr.mxu0 0.0
    %793 = vmatpush1.msra.mxu0 0.0
    %794 = vmatprep.subr.mxu0 0.0
    %795 = vmatpush1.msra.mxu0 0.0
    %796 = vmatprep.subr.mxu0 0.0
    %797 = vmatpush1.msra.mxu0 0.0
    %798 = vmatprep.subr.mxu0 0.0
    %799 = vmatpush1.msra.mxu0 0.0
    %800 = vmatprep.mubr.f32.mxu0 0.0
    %801 = vmatmul.mubr.f32.gmra.mrb[0].mxu0 %v684
    %v802 = vpop.f32.mrb[0].mxu0
    %v803 = vadd.f32 0.0, %v802
    %v804 = vpop.f32.mrb[0].mxu0
    %v805 = vadd.f32 0.0, %v804
    %806 = vmatprep.mubr.f32.mxu0 0.0
    %807 = vmatmul.mubr.f32.gmra.mrb[0].mxu0 %v685
    %v808 = vpop.f32.mrb[0].mxu0
    %v809 = vadd.f32 0.0, %v808
    %v810 = vpop.f32.mrb[0].mxu0
    %v811 = vadd.f32 0.0, %v810
    %812 = vmatprep.mubr.f32.mxu0 0.0
    %813 = vmatmul.mubr.f32.gmra.mrb[0].mxu0 %v686
    %v814 = vpop.f32.mrb[0].mxu0
    %v815 = vadd.f32 0.0, %v814
    %v816 = vpop.f32.mrb[0].mxu0
    %v817 = vadd.f32 0.0, %v816
    %818 = vmatprep.mubr.f32.mxu0 0.0
    %819 = vmatmul.mubr.f32.gmra.mrb[0].mxu0 %v687
    %v820 = vpop.f32.mrb[0].mxu0
    %v821 = vadd.f32 0.0, %v820
    %v822 = vpop.f32.mrb[0].mxu0
    %v823 = vadd.f32 0.0, %v822
    %824 = vdwg.mxu0
    %825 = vmatprep.subr.mxu0 0.0
    %826 = vmatpush1.msra.mxu0 %v690
    %827 = vmatprep.subr.mxu0 0.0
    %828 = vmatpush1.msra.mxu0 %v693
    %829 = vmatprep.subr.mxu0 0.0
    %830 = vmatpush1.msra.mxu0 %v696
    %831 = vmatprep.subr.mxu0 0.0
    %832 = vmatpush1.msra.mxu0 %v699
    %833 = vmatprep.subr.mxu0 0.0
    %834 = vmatpush1.msra.mxu0 %v702
    %835 = vmatprep.subr.mxu0 0.0
    %836 = vmatpush1.msra.mxu0 %v705
    %837 = vmatprep.subr.mxu0 0.0
    %838 = vmatpush1.msra.mxu0 %v708
    %839 = vmatprep.subr.mxu0 0.0
    %840 = vmatpush1.msra.mxu0 %v711
    %841 = vmatprep.subr.mxu0 0.0
    %842 = vmatpush1.msra.mxu0 %v714
    %843 = vmatprep.subr.mxu0 0.0
    %844 = vmatpush1.msra.mxu0 %v717
    %845 = vmatprep.subr.mxu0 0.0
    %846 = vmatpush1.msra.mxu0 %v720
    %847 = vmatprep.subr.mxu0 0.0
    %848 = vmatpush1.msra.mxu0 %v723
    %849 = vmatprep.subr.mxu0 0.0
    %850 = vmatpush1.msra.mxu0 %v726
    %851 = vmatprep.subr.mxu0 0.0
    %852 = vmatpush1.msra.mxu0 %v729
    %853 = vmatprep.subr.mxu0 0.0
    %854 = vmatpush1.msra.mxu0 %v732
    %855 = vmatprep.subr.mxu0 0.0
    %856 = vmatpush1.msra.mxu0 %v735
    %857 = vmatprep.subr.mxu0 0.0
    %858 = vmatpush1.msra.mxu0 0.0
    %859 = vmatprep.subr.mxu0 0.0
    %860 = vmatpush1.msra.mxu0 0.0
    %861 = vmatprep.subr.mxu0 0.0
    %862 = vmatpush1.msra.mxu0 0.0
    %863 = vmatprep.subr.mxu0 0.0
    %864 = vmatpush1.msra.mxu0 0.0
    %865 = vmatprep.subr.mxu0 0.0
    %866 = vmatpush1.msra.mxu0 0.0
    %867 = vmatprep.subr.mxu0 0.0
    %868 = vmatpush1.msra.mxu0 0.0
    %869 = vmatprep.subr.mxu0 0.0
    %870 = vmatpush1.msra.mxu0 0.0
    %871 = vmatprep.subr.mxu0 0.0
    %872 = vmatpush1.msra.mxu0 0.0
    %873 = vmatprep.subr.mxu0 0.0
    %874 = vmatpush1.msra.mxu0 0.0
    %875 = vmatprep.subr.mxu0 0.0
    %876 = vmatpush1.msra.mxu0 0.0
    %877 = vmatprep.subr.mxu0 0.0
    %878 = vmatpush1.msra.mxu0 0.0
    %879 = vmatprep.subr.mxu0 0.0
    %880 = vmatpush1.msra.mxu0 0.0
    %881 = vmatprep.subr.mxu0 0.0
    %882 = vmatpush1.msra.mxu0 0.0
    %883 = vmatprep.subr.mxu0 0.0
    %884 = vmatpush1.msra.mxu0 0.0
    %885 = vmatprep.subr.mxu0 0.0
    %886 = vmatpush1.msra.mxu0 0.0
    %887 = vmatprep.subr.mxu0 0.0
    %888 = vmatpush1.msra.mxu0 0.0
    %889 = vmatprep.mubr.f32.mxu0 0.0
    %890 = vmatmul.mubr.f32.gmra.mrb[0].mxu0 %v684
    %v891 = vpop.f32.mrb[0].mxu0
    %v892 = vadd.f32 0.0, %v891
    %v893 = vpop.f32.mrb[0].mxu0
    %894 = vmatprep.mubr.f32.mxu0 0.0
    %895 = vmatmul.mubr.f32.gmra.mrb[0].mxu0 %v685
    %v896 = vpop.f32.mrb[0].mxu0
    %v897 = vadd.f32 0.0, %v896
    %v898 = vpop.f32.mrb[0].mxu0
    %899 = vmatprep.mubr.f32.mxu0 0.0
    %900 = vmatmul.mubr.f32.gmra.mrb[0].mxu0 %v686
    %v901 = vpop.f32.mrb[0].mxu0
    %v902 = vadd.f32 0.0, %v901
    %v903 = vpop.f32.mrb[0].mxu0
    %904 = vmatprep.mubr.f32.mxu0 0.0
    %905 = vmatmul.mubr.f32.gmra.mrb[0].mxu0 %v687
    %v906 = vpop.f32.mrb[0].mxu0
    %v907 = vadd.f32 0.0, %v906
    %v908 = vpop.f32.mrb[0].mxu0
    %909 = vdwg.mxu0
    %v910 = vrot.slane %v803, 7
    %v911 = vrot.slane %v809, 7
    %v912 = vrot.slane %v815, 7
    %v913 = vrot.slane %v821, 7
    %v914 = vsel %vm325, %v912, %v913
    %v915 = vsel %vm325, %v911, %v912
    %v916 = vsel %vm325, %v910, %v911
    %v917 = vsel %vm325, %v913, %v910
    %v918 = vsel %vm88, %v917, 0.0
    %v919 = vsel %vm89, %v916, 0.0
    %v920 = vsel %vm88, %v915, 0.0
    %v921 = vsel %vm89, %v914, 0.0
    %v922 = vadd.f32 %v805, %v918
    %v923 = vadd.f32 %v811, %v919
    %v924 = vadd.f32 %v817, %v920
    %v925 = vadd.f32 %v823, %v921
    %v926 = vrot.slane %v892, 1
    %v927 = vrot.slane %v897, 1
    %v928 = vrot.slane %v902, 1
    %v929 = vrot.slane %v907, 1
    %v930 = vsel %vm342, %v928, %v929
    %v931 = vsel %vm342, %v927, %v928
    %v932 = vsel %vm342, %v926, %v927
    %v933 = vsel %vm342, %v929, %v926
    %v934 = vsel %vm90, %v932, 0.0
    %v935 = vsel %vm91, %v931, 0.0
    %v936 = vsel %vm90, %v930, 0.0
    %v937 = vsel %vm91, %v933, 0.0
    %v938 = vadd.f32 %v922, %v934
    %v939 = vadd.f32 %v923, %v935
    %v940 = vadd.f32 %v924, %v936
    %v941 = vadd.f32 %v925, %v937
    %v942 = vld [vmem:[%s7] sm:$0x1]
    %v944 = vlaneseq
    %v945 = vshrl.u32 %v944, 7
    %v946 = vsub.s32 0, %v945
    %v947 = vrot.slane %v942, %v946
    %v949 = vadd.f32 %v938, %v947
    %v950 = vadd.f32 %v939, %v947
    %v951 = vadd.f32 %v940, %v947
    %v952 = vadd.f32 %v941, %v947
    %953 = vst [vmem:[#allocation10] sm:$0xff] %v949
    %954 = vst [vmem:[#allocation10 + $0x8] sm:$0xff] %v950
    %955 = vst [vmem:[#allocation10 + $0x10] sm:$0xff] %v951
    %956 = vst [vmem:[#allocation10 + $0x18] sm:$0xff] %v952
    // Predicated region
    $region50: #{tpu_custom_call.1} parent=1 // pred_check
      _
    $region51: #{tpu_custom_call.1} parent=1 // pred_check_branch
      %958 = sbr.rel (0) target = $region53
    $region52: #{tpu_custom_call.1} parent=1 // pred_region
      %s960 = ssub.s32 512, 512
      %961 = vsyncadd [#allocation4], %s960
      %s962 = sshll.u32 [#allocation10], 4
      %s963 = int_to_ptr.vmem [resolvable:$true] %s962
      %968 = dma.vmem_to_hbm [thread:$0]  %s963, 512, %s8, [#allocation4], 128, 128, 8
    $region53: #{tpu_custom_call.1} parent=1 // pred_fallthru
      _
    // Predicated region
    $region54: #{tpu_custom_call.1} parent=1 // pred_check
      _
    $region55: #{tpu_custom_call.1} parent=1 // pred_check_branch
      %970 = sbr.rel (0) target = $region57
    $region56: #{tpu_custom_call.1} parent=1 // pred_region
      %971 = dma.done [#allocation4], 512
    $region57: #{tpu_custom_call.1} parent=1 // pred_fallthru
      _
    %972 = vsyncpa [#allocation3], 1
    %973 = vsyncpa [#allocation6], 1
    %974 = vsyncpa [#allocation9], 1
    %975 = vsyncpa [#allocation4], 1

</llo_original>
